<compile_context>
chip_gen: v6e
topology: v6e:2x2x1
jax: 0.10.0
libtpu: 0.0.40
codegen_flags: <defaults>
</compile_context>

<pallas_src>
import jax
import jax.numpy as jnp
from jax.experimental import pallas as pl
from jax.experimental.pallas import tpu as pltpu

HIDDEN = 64


def _round_up(n, m):
    return -(-n // m) * m


def actor_critic_kernel(x_ref, w1_ref, wh_ref, out_ref):
    # wh_ref rows: [0, H_pad) head weights (+ bias row), then 8 extra rows:
    #   row H_pad   = additive softmax mask (0 on actor lanes, -1e30 elsewhere)
    #   row H_pad+1 = value-lane selector  (1 at lane A, 0 elsewhere)
    h_rows = wh_ref.shape[0] - 8

    x = x_ref[...]                              # [bb, S_pad]   (lane S == 1.0)
    w1 = w1_ref[...]                            # [S_pad, H_pad]
    wh = wh_ref[0:h_rows, :]                    # [H_pad, A_pad]
    mask_row = wh_ref[h_rows:h_rows + 1, :]     # [1, A_pad]
    sel_row = wh_ref[h_rows + 1:h_rows + 2, :]  # [1, A_pad]

    # fc1 (+ folded bias via the constant-1 lane of x) and ReLU.
    # h lane `hidden` comes out exactly 1.0 (bias carrier for the heads).
    h = jnp.maximum(jnp.dot(x, w1, preferred_element_type=jnp.float32), 0.0)

    # fused heads (+ folded biases): lanes [0,A) = actor logits, lane A = value.
    head = jnp.dot(h, wh, preferred_element_type=jnp.float32)   # [bb, A_pad]

    # masked softmax over the actor lanes only
    logits = head + mask_row
    m = jnp.max(logits, axis=-1, keepdims=True)
    e = jnp.exp(logits - m)                     # non-actor lanes underflow to 0
    denom = jnp.sum(e, axis=-1, keepdims=True)
    inv = pl.reciprocal(denom, approx=True)     # EUP slot
    inv = inv * (2.0 - denom * inv)             # one Newton step -> f32-accurate
    probs = e * inv                             # exact zeros outside actor lanes

    # probs in lanes [0,A), critic value in lane A, zeros elsewhere
    out_ref[...] = (probs + head * sel_row).astype(out_ref.dtype)


def pack_params(params, state_size, action_size, hidden=HIDDEN):
    """Pack weights+biases (and softmax mask / value selector rows) into 2 slabs."""
    s_pad = _round_up(state_size + 1, 8)        # + constant-1 bias lane
    h_pad = _round_up(hidden + 1, 8)            # + bias-carrier hidden lane
    a_pad = _round_up(action_size + 1, 8)       # actor lanes + value lane

    # W1 slab: [S_pad, H_pad].  Row `state_size` carries b1 and forces the
    # bias-carrier hidden lane to 1.
    w1p = jnp.zeros((s_pad, h_pad), jnp.float32)
    w1p = w1p.at[:state_size, :hidden].set(params["w1_t"])
    w1p = w1p.at[state_size, :hidden].set(params["b1"][0])
    w1p = w1p.at[state_size, hidden].set(1.0)

    # Head slab: [H_pad + 8, A_pad].
    whp = jnp.zeros((h_pad + 8, a_pad), jnp.float32)
    whp = whp.at[:hidden, :action_size].set(params["wa_t"])
    whp = whp.at[:hidden, action_size].set(params["wc_t"][:, 0])
    whp = whp.at[hidden, :action_size].set(params["ba"][0])          # bias row
    whp = whp.at[hidden, action_size].set(params["bc"][0, 0])
    mask = jnp.where(jnp.arange(a_pad) < action_size, 0.0, -1e30)
    whp = whp.at[h_pad, :].set(mask)
    sel = (jnp.arange(a_pad) == action_size).astype(jnp.float32)
    whp = whp.at[h_pad + 1, :].set(sel)
    return w1p, whp


def actor_critic_forward(x, w1p, whp, action_size, *, block_b=4096):
    """x: [B, state_size] f32.  (w1p, whp): output of pack_params."""
    B, S = x.shape
    s_pad, h_pad = w1p.shape
    wh_rows, a_pad = whp.shape
    assert S + 1 <= s_pad

    # batch tiling: big tiles to amortize per-step overhead, but keep >= 2 grid
    # steps when the batch allows so v7x's second TensorCore participates.
    bp0 = max(8, _round_up(B, 8))
    bb = min(block_b, bp0)
    if bp0 >= 16:
        bb = min(bb, max(8, _round_up(bp0 // 2, 8)))
    bp = _round_up(bp0, bb)

    # narrow input: state + constant-1 bias lane, padded only to a multiple of 8
    x_pad = jnp.zeros((bp, s_pad), jnp.float32)
    x_pad = x_pad.at[:B, :S].set(x)
    x_pad = x_pad.at[:, S].set(1.0)             # folds fc1 bias into the matmul

    cost = pl.CostEstimate(
        flops=2 * bp * (s_pad * h_pad + h_pad * a_pad),
        transcendentals=bp * (a_pad + 1),
        bytes_accessed=4 * (bp * s_pad + s_pad * h_pad + wh_rows * a_pad + bp * a_pad),
    )

    out = pl.pallas_call(
        actor_critic_kernel,
        out_shape=jax.ShapeDtypeStruct((bp, a_pad), jnp.float32),
        grid=(bp // bb,),
        in_specs=[
            pl.BlockSpec((bb, s_pad), lambda i: (i, 0)),        # x: tiled over batch
            pl.BlockSpec((s_pad, h_pad), lambda i: (0, 0)),     # W1 slab (constant)
            pl.BlockSpec((wh_rows, a_pad), lambda i: (0, 0)),   # head slab (constant)
        ],
        out_specs=pl.BlockSpec((bb, a_pad), lambda i: (i, 0)),  # narrow, lane-dense
        compiler_params=pltpu.CompilerParams(
            dimension_semantics=("parallel",)),
        cost_estimate=cost,
    )(x_pad, w1p, whp)

    probs = out[:B, :action_size]
    value = out[:B, action_size:action_size + 1]
    return probs, value


def init_params(key, state_size, action_size, hidden=HIDDEN):
    """Deterministic init mimicking nn.Linear's uniform(-1/sqrt(fan_in), 1/sqrt(fan_in))."""
    def linear(key, fan_in, fan_out):
        kw, kb = jax.random.split(key)
        bound = 1.0 / jnp.sqrt(fan_in)
        w_t = jax.random.uniform(kw, (fan_in, fan_out), jnp.float32, -bound, bound)
        b = jax.random.uniform(kb, (1, fan_out), jnp.float32, -bound, bound)
        return w_t, b

    k1, k2, k3 = jax.random.split(key, 3)
    w1_t, b1 = linear(k1, state_size, hidden)
    wa_t, ba = linear(k2, hidden, action_size)
    wc_t, bc = linear(k3, hidden, 1)
    return {"w1_t": w1_t, "b1": b1, "wa_t": wa_t, "ba": ba, "wc_t": wc_t, "bc": bc}


def reference_forward(x, params):
    h = jnp.maximum(x @ params["w1_t"] + params["b1"], 0.0)
    logits = h @ params["wa_t"] + params["ba"]
    probs = jax.nn.softmax(logits, axis=-1)
    value = h @ params["wc_t"] + params["bc"]
    return probs, value


if __name__ == "__main__":
    B, state_size, action_size = 8, 16, 4

    key = jax.random.PRNGKey(0)
    kx, kp = jax.random.split(key)
    x = jax.random.normal(kx, (B, state_size), jnp.float32)
    params = init_params(kp, state_size, action_size)
    w1p, whp = pack_params(params, state_size, action_size)

    probs, value = actor_critic_forward(x, w1p, whp, action_size)
    jax.block_until_ready((probs, value))

    # sanity-check against pure-JAX reference
    ref_probs, ref_value = reference_forward(x, params)
    assert probs.shape == (B, action_size) and value.shape == (B, 1)
    assert jnp.allclose(probs, ref_probs, atol=1e-5, rtol=1e-5)
    assert jnp.allclose(value, ref_value, atol=1e-5, rtol=1e-5)
    assert jnp.allclose(jnp.sum(probs, axis=-1), 1.0, atol=1e-5)

    print("KERNEL_OK")
</pallas_src>

<mosaic_0001>
module attributes {stable_mosaic.version = 11 : i64} {
  func.func @actor_critic_kernel(%arg0: i32, %arg1: memref<8x24xf32, #tpu.memory_space<vmem>>, %arg2: memref<24x72xf32, #tpu.memory_space<vmem>>, %arg3: memref<80x8xf32, #tpu.memory_space<vmem>>, %arg4: memref<8x8xf32, #tpu.memory_space<vmem>>) attributes {dimension_semantics = [#tpu.dimension_semantics<parallel>], iteration_bounds = array<i64: 1>, scalar_prefetch = 0 : i64, scratch_operands = 0 : i64, tpu.core_type = #tpu.core_type<tc>, window_params = [{transform_indices = @transform_0, window_bounds = array<i64: 8, 24>}, {pipeline_mode = #tpu.pipeline_mode<synchronous>, transform_indices = @transform_1, window_bounds = array<i64: 24, 72>}, {pipeline_mode = #tpu.pipeline_mode<synchronous>, transform_indices = @transform_2, window_bounds = array<i64: 80, 8>}, {transform_indices = @transform_3, window_bounds = array<i64: 8, 8>}]} {
    %c0 = arith.constant 0 : index
    %c0_0 = arith.constant 0 : index
    %0 = vector.load %arg1[%c0, %c0_0] : memref<8x24xf32, #tpu.memory_space<vmem>>, vector<8x24xf32>
    %c0_1 = arith.constant 0 : index
    %c0_2 = arith.constant 0 : index
    %1 = vector.load %arg2[%c0_1, %c0_2] : memref<24x72xf32, #tpu.memory_space<vmem>>, vector<24x72xf32>
    %c0_3 = arith.constant 0 : index
    %c0_4 = arith.constant 0 : index
    %2 = vector.load %arg3[%c0_3, %c0_4] : memref<80x8xf32, #tpu.memory_space<vmem>>, vector<72x8xf32>
    %c72 = arith.constant 72 : index
    %c0_5 = arith.constant 0 : index
    %3 = vector.load %arg3[%c72, %c0_5] : memref<80x8xf32, #tpu.memory_space<vmem>>, vector<1x8xf32>
    %c73 = arith.constant 73 : index
    %c0_6 = arith.constant 0 : index
    %4 = vector.load %arg3[%c73, %c0_6] : memref<80x8xf32, #tpu.memory_space<vmem>>, vector<1x8xf32>
    %cst = arith.constant dense<0.000000e+00> : vector<8x72xf32>
    %5 = tpu.matmul %0, %1, %cst {dimension_numbers = #tpu.dot_dimension_numbers<[1], [0], [0], [1], [0, 0, 1, 1], [], []>} : vector<8x24xf32>, vector<24x72xf32>, vector<8x72xf32> -> vector<8x72xf32>
    %cst_7 = arith.constant 0.000000e+00 : f32
    %6 = vector.broadcast %cst_7 : f32 to vector<8x72xf32>
    %7 = arith.maximumf %5, %6 : vector<8x72xf32>
    %cst_8 = arith.constant dense<0.000000e+00> : vector<8x8xf32>
    %8 = tpu.matmul %7, %2, %cst_8 {dimension_numbers = #tpu.dot_dimension_numbers<[1], [0], [0], [1], [0, 0, 1, 1], [], []>} : vector<8x72xf32>, vector<72x8xf32>, vector<8x8xf32> -> vector<8x8xf32>
    %9 = vector.broadcast %3 : vector<1x8xf32> to vector<8x8xf32>
    %10 = arith.addf %8, %9 : vector<8x8xf32>
    %cst_9 = arith.constant dense<0xFF800000> : vector<8xf32>
    %11 = vector.multi_reduction <maximumf>, %10, %cst_9 [1] : vector<8x8xf32> to vector<8xf32>
    %12 = vector.shape_cast %11 : vector<8xf32> to vector<8x1xf32>
    %13 = vector.broadcast %12 : vector<8x1xf32> to vector<8x8xf32>
    %14 = arith.subf %10, %13 : vector<8x8xf32>
    %15 = math.exp %14 : vector<8x8xf32>
    %cst_10 = arith.constant dense<0.000000e+00> : vector<8xf32>
    %16 = vector.multi_reduction <add>, %15, %cst_10 [1] : vector<8x8xf32> to vector<8xf32>
    %17 = vector.shape_cast %16 : vector<8xf32> to vector<8x1xf32>
    %18 = tpu.reciprocal %17 {approx = true} : vector<8x1xf32> -> vector<8x1xf32>
    %19 = arith.mulf %17, %18 : vector<8x1xf32>
    %cst_11 = arith.constant 2.000000e+00 : f32
    %20 = vector.broadcast %cst_11 : f32 to vector<8x1xf32>
    %21 = arith.subf %20, %19 : vector<8x1xf32>
    %22 = arith.mulf %18, %21 : vector<8x1xf32>
    %23 = vector.broadcast %22 : vector<8x1xf32> to vector<8x8xf32>
    %24 = arith.mulf %15, %23 : vector<8x8xf32>
    %25 = vector.broadcast %4 : vector<1x8xf32> to vector<8x8xf32>
    %26 = arith.mulf %8, %25 : vector<8x8xf32>
    %27 = arith.addf %24, %26 : vector<8x8xf32>
    %c0_12 = arith.constant 0 : index
    %c0_13 = arith.constant 0 : index
    %28 = vector.load %arg4[%c0_12, %c0_13] : memref<8x8xf32, #tpu.memory_space<vmem>>, vector<8x8xf32>
    tpu.vector_store %arg4[%c0_12, %c0_13], %27 {strides = array<i32>} : memref<8x8xf32, #tpu.memory_space<vmem>>, vector<8x8xf32>,
    return
  }
  func.func @transform_0(%arg0: i32) -> (i32, i32) {
    %c0_i32 = arith.constant 0 : i32
    %c0_i32_0 = arith.constant 0 : i32
    return %arg0, %c0_i32 : i32, i32
  }
  func.func @transform_1(%arg0: i32) -> (i32, i32) {
    %c0_i32 = arith.constant 0 : i32
    %c0_i32_0 = arith.constant 0 : i32
    %c0_i32_1 = arith.constant 0 : i32
    return %c0_i32, %c0_i32_0 : i32, i32
  }
  func.func @transform_2(%arg0: i32) -> (i32, i32) {
    %c0_i32 = arith.constant 0 : i32
    %c0_i32_0 = arith.constant 0 : i32
    %c0_i32_1 = arith.constant 0 : i32
    return %c0_i32, %c0_i32_0 : i32, i32
  }
  func.func @transform_3(%arg0: i32) -> (i32, i32) {
    %c0_i32 = arith.constant 0 : i32
    %c0_i32_0 = arith.constant 0 : i32
    return %arg0, %c0_i32 : i32, i32
  }
}

</mosaic_0001>

<llo_original>
// kernel: tpu_custom_call.1
$region0: #{tpu_custom_call.1}
  #allocation0 [shape = 'u32[]', space=smem, size = 0x4, offset = 0x4, fixed_abs, tag = 'smem constant byte address 0x4 - core index']
  #allocation1 [shape = 'u32[144,128]{1,0:T(1,128)}', space=vmem, size = 0x12000, scoped, tag = 'internal scratch']
  %s0 = inlined_call_operand.vmem [shape: f32[8,24], index: 0, kind: input, shape index: {}]
  %s1 = inlined_call_operand.vmem [shape: f32[24,72], index: 1, kind: input, shape index: {}]
  %s2 = inlined_call_operand.vmem [shape: f32[80,8], index: 2, kind: input, shape index: {}]
  %s3 = inlined_call_operand.hbm [shape: f32[8,8], index: 3, kind: output, shape index: {}]
  %s4 = sld [smem:[#allocation0]]
  $region22: #{tpu_custom_call.1} parent=0
    _
  %s6 = ssub.s32 1, %s4
  %s7 = scalar_select 0, %s6, %s4
  $region1: #{tpu_custom_call.1} parent=0
    #allocation2 [shape = 'u8[4096]{0}', space=vmem, size = 0x1000, scoped, tag = 'output window, operand 0, single buffered']
    #allocation3 [shape = 's32[1]{0}', space=sflag, size = 0x4, scoped, tag = 'scoped memory for tpu_custom_call.1']
    %8 = vsyncpa [#allocation3], 0
    // Predicated region
    $region2: #{tpu_custom_call.1} parent=1 // pred_check
      _
    $region3: #{tpu_custom_call.1} parent=1 // pred_check_branch
      %10 = sbr.rel (0) target = $region5
    $region4: #{tpu_custom_call.1} parent=1 // pred_region
      _
    $region5: #{tpu_custom_call.1} parent=1 // pred_fallthru
      _
    // Predicated region
    $region6: #{tpu_custom_call.1} parent=1 // pred_check
      _
    $region7: #{tpu_custom_call.1} parent=1 // pred_check_branch
      %12 = sbr.rel (0) target = $region9
    $region8: #{tpu_custom_call.1} parent=1 // pred_region
      _
    $region9: #{tpu_custom_call.1} parent=1 // pred_fallthru
      _
    // Predicated region
    $region10: #{tpu_custom_call.1} parent=1 // pred_check
      _
    $region11: #{tpu_custom_call.1} parent=1 // pred_check_branch
      %14 = sbr.rel (0) target = $region13
    $region12: #{tpu_custom_call.1} parent=1 // pred_region
      _
    $region13: #{tpu_custom_call.1} parent=1 // pred_fallthru
      _
    %v15 = vld [vmem:[%s0] sm:$0xff]
    %v16 = vld [vmem:[%s1] sm:$0xff]
    %v17 = vld [vmem:[%s1 + $0x8] sm:$0xff]
    %v18 = vld [vmem:[%s1 + $0x10] sm:$0xff]
    %v19 = vld [vmem:[%s2] sm:$0xff]
    %v20 = vld [vmem:[%s2 + $0x8] sm:$0xff]
    %v21 = vld [vmem:[%s2 + $0x10] sm:$0xff]
    %v22 = vld [vmem:[%s2 + $0x18] sm:$0xff]
    %v23 = vld [vmem:[%s2 + $0x20] sm:$0xff]
    %v24 = vld [vmem:[%s2 + $0x28] sm:$0xff]
    %v25 = vld [vmem:[%s2 + $0x30] sm:$0xff]
    %v26 = vld [vmem:[%s2 + $0x38] sm:$0xff]
    %v27 = vld [vmem:[%s2 + $0x40] sm:$0xff]
    %v28 = vld [vmem:[%s2 + $0x48] sm:$0x1]
    %v29 = vld [vmem:[%s2 + $0x49] sm:$0x1]
    %vm30 = vcmask 195584
    %v32 = vsel %vm30, %v15, 0
    %34 = vmatprep.subr.mxu0 0.0
    %35 = vmatpush1.msra.mxu0 0.0
    %36 = vmatprep.subr.mxu0 0.0
    %37 = vmatpush1.msra.mxu0 0.0
    %38 = vmatprep.subr.mxu0 0.0
    %39 = vmatpush1.msra.mxu0 0.0
    %40 = vmatprep.subr.mxu0 0.0
    %41 = vmatpush1.msra.mxu0 0.0
    %42 = vmatprep.subr.mxu0 0.0
    %43 = vmatpush1.msra.mxu0 0.0
    %44 = vmatprep.subr.mxu0 0.0
    %45 = vmatpush1.msra.mxu0 0.0
    %46 = vmatprep.subr.mxu0 0.0
    %47 = vmatpush1.msra.mxu0 0.0
    %48 = vmatprep.subr.mxu0 0.0
    %49 = vmatpush1.msra.mxu0 0.0
    %50 = vmatprep.subr.mxu0 0.0
    %51 = vmatpush1.msra.mxu0 0.0
    %52 = vmatprep.subr.mxu0 0.0
    %53 = vmatpush1.msra.mxu0 0.0
    %54 = vmatprep.subr.mxu0 0.0
    %55 = vmatpush1.msra.mxu0 0.0
    %56 = vmatprep.subr.mxu0 0.0
    %57 = vmatpush1.msra.mxu0 0.0
    %58 = vmatprep.subr.mxu0 0.0
    %59 = vmatpush1.msra.mxu0 0.0
    %60 = vmatprep.subr.mxu0 0.0
    %61 = vmatpush1.msra.mxu0 %v18
    %62 = vmatprep.subr.mxu0 0.0
    %63 = vmatpush1.msra.mxu0 %v17
    %64 = vmatprep.subr.mxu0 0.0
    %65 = vmatpush1.msra.mxu0 %v16
    %66 = vmatprep.subr.mxu0 0.0
    %67 = vmatpush2.msra.mxu0 0.0
    %68 = vmatprep.subr.mxu0 0.0
    %69 = vmatpush2.msra.mxu0 0.0
    %70 = vmatprep.subr.mxu0 0.0
    %71 = vmatpush2.msra.mxu0 0.0
    %72 = vmatprep.subr.mxu0 0.0
    %73 = vmatpush2.msra.mxu0 0.0
    %74 = vmatprep.subr.mxu0 0.0
    %75 = vmatpush2.msra.mxu0 0.0
    %76 = vmatprep.subr.mxu0 0.0
    %77 = vmatpush2.msra.mxu0 0.0
    %78 = vmatprep.subr.mxu0 0.0
    %79 = vmatpush2.msra.mxu0 0.0
    %80 = vmatprep.subr.mxu0 0.0
    %81 = vmatpush2.msra.mxu0 0.0
    %82 = vmatprep.subr.mxu0 0.0
    %83 = vmatpush2.msra.mxu0 0.0
    %84 = vmatprep.subr.mxu0 0.0
    %85 = vmatpush2.msra.mxu0 0.0
    %86 = vmatprep.subr.mxu0 0.0
    %87 = vmatpush2.msra.mxu0 0.0
    %88 = vmatprep.subr.mxu0 0.0
    %89 = vmatpush2.msra.mxu0 0.0
    %90 = vmatprep.subr.mxu0 0.0
    %91 = vmatpush2.msra.mxu0 0.0
    %92 = vmatprep.subr.mxu0 0.0
    %93 = vmatpush2.msra.mxu0 0.0
    %94 = vmatprep.subr.mxu0 0.0
    %95 = vmatpush2.msra.mxu0 0.0
    %96 = vmatprep.subr.mxu0 0.0
    %97 = vmatpush2.msra.mxu0 0.0
    %98 = vmatprep.mubr.f32.mxu0 0.0
    %99 = vmatmul.mubr.f32.gmra.mxu0 %v32
    %v100 = vpop.f32.mrf.mxu0
    %v101 = vadd.f32 0.0, %v100
    %v102 = vpop.f32.mrf.mxu0
    %103 = vdwg.mxu0
    %v104 = vmax.f32 %v101, 0.0
    %vm105 = vcmask 588800
    %v107 = vsel %vm105, %v104, 0
    %109 = vmatprep.subr.mxu0 0.0
    %110 = vmatpush1.msra.mxu0 0.0
    %111 = vmatprep.subr.mxu0 0.0
    %112 = vmatpush1.msra.mxu0 0.0
    %113 = vmatprep.subr.mxu0 0.0
    %114 = vmatpush1.msra.mxu0 0.0
    %115 = vmatprep.subr.mxu0 0.0
    %116 = vmatpush1.msra.mxu0 0.0
    %117 = vmatprep.subr.mxu0 0.0
    %118 = vmatpush1.msra.mxu0 0.0
    %119 = vmatprep.subr.mxu0 0.0
    %120 = vmatpush1.msra.mxu0 0.0
    %121 = vmatprep.subr.mxu0 0.0
    %122 = vmatpush1.msra.mxu0 0.0
    %123 = vmatprep.subr.mxu0 0.0
    %124 = vmatpush1.msra.mxu0 %v27
    %125 = vmatprep.subr.mxu0 0.0
    %126 = vmatpush1.msra.mxu0 %v26
    %127 = vmatprep.subr.mxu0 0.0
    %128 = vmatpush1.msra.mxu0 %v25
    %129 = vmatprep.subr.mxu0 0.0
    %130 = vmatpush1.msra.mxu0 %v24
    %131 = vmatprep.subr.mxu0 0.0
    %132 = vmatpush1.msra.mxu0 %v23
    %133 = vmatprep.subr.mxu0 0.0
    %134 = vmatpush1.msra.mxu0 %v22
    %135 = vmatprep.subr.mxu0 0.0
    %136 = vmatpush1.msra.mxu0 %v21
    %137 = vmatprep.subr.mxu0 0.0
    %138 = vmatpush1.msra.mxu0 %v20
    %139 = vmatprep.subr.mxu0 0.0
    %140 = vmatpush1.msra.mxu0 %v19
    %141 = vmatprep.subr.mxu0 0.0
    %142 = vmatpush2.msra.mxu0 0.0
    %143 = vmatprep.subr.mxu0 0.0
    %144 = vmatpush2.msra.mxu0 0.0
    %145 = vmatprep.subr.mxu0 0.0
    %146 = vmatpush2.msra.mxu0 0.0
    %147 = vmatprep.subr.mxu0 0.0
    %148 = vmatpush2.msra.mxu0 0.0
    %149 = vmatprep.subr.mxu0 0.0
    %150 = vmatpush2.msra.mxu0 0.0
    %151 = vmatprep.subr.mxu0 0.0
    %152 = vmatpush2.msra.mxu0 0.0
    %153 = vmatprep.subr.mxu0 0.0
    %154 = vmatpush2.msra.mxu0 0.0
    %155 = vmatprep.subr.mxu0 0.0
    %156 = vmatpush2.msra.mxu0 0.0
    %157 = vmatprep.subr.mxu0 0.0
    %158 = vmatpush2.msra.mxu0 0.0
    %159 = vmatprep.subr.mxu0 0.0
    %160 = vmatpush2.msra.mxu0 0.0
    %161 = vmatprep.subr.mxu0 0.0
    %162 = vmatpush2.msra.mxu0 0.0
    %163 = vmatprep.subr.mxu0 0.0
    %164 = vmatpush2.msra.mxu0 0.0
    %165 = vmatprep.subr.mxu0 0.0
    %166 = vmatpush2.msra.mxu0 0.0
    %167 = vmatprep.subr.mxu0 0.0
    %168 = vmatpush2.msra.mxu0 0.0
    %169 = vmatprep.subr.mxu0 0.0
    %170 = vmatpush2.msra.mxu0 0.0
    %171 = vmatprep.subr.mxu0 0.0
    %172 = vmatpush2.msra.mxu0 0.0
    %173 = vmatprep.mubr.f32.mxu0 0.0
    %174 = vmatmul.mubr.f32.gmra.mxu0 %v107
    %v175 = vpop.f32.mrf.mxu0
    %v176 = vadd.f32 0.0, %v175
    %v177 = vpop.f32.mrf.mxu0
    %178 = vdwg.mxu0
    %v179 = vlaneseq
    %v180 = vshrl.u32 %v179, 7
    %v181 = vsub.s32 0, %v180
    %v182 = vrot.slane %v28, %v181
    %v183 = vadd.f32 %v176, %v182
    %vm184 = vcmask 64512
    %v185 = vsel %vm184, %v183, -inf
    %186 = vmax.xlane.f32.xlu0 %v185
    %v187 = vpop.xlane.xlu0 %186
    %v188 = vsub.f32 %v183, %v187
    %v189 = vmul.f32 %v188, 1.442695
    %v190 = vpow.pop %v189
    %v191 = vsel %vm184, %v190, 0.0
    %192 = vadd.xlane.f32.xlu0 %v191
    %v193 = vpop.xlane.xlu0 %192
    %v194 = vrcp.pop %v193
    %v195 = vmul.f32 %v193, %v194
    %v196 = vsub.f32 2.0, %v195
    %v197 = vmul.f32 %v194, %v196
    %v198 = vmul.f32 %v190, %v197
    %v199 = vlaneseq
    %v200 = vshrl.u32 %v199, 7
    %v201 = vsub.s32 0, %v200
    %v202 = vrot.slane %v29, %v201
    %v203 = vmul.f32 %v176, %v202
    %v204 = vadd.f32 %v198, %v203
    %205 = vst.msk [vmem:[#allocation2] sm:$0xff] %vm184, %v204
    // Predicated region
    $region14: #{tpu_custom_call.1} parent=1 // pred_check
      _
    $region15: #{tpu_custom_call.1} parent=1 // pred_check_branch
      %207 = sbr.rel (0) target = $region17
    $region16: #{tpu_custom_call.1} parent=1 // pred_region
      %s209 = ssub.s32 128, 128
      %210 = vsyncadd [#allocation3], %s209
      %s212 = sshll.u32 [#allocation2], 4
      %s213 = int_to_ptr.vmem [resolvable:$true] %s212
      %215 = dma.vmem_to_hbm [thread:$0]  %s213, 128, %s3, [#allocation3]
    $region17: #{tpu_custom_call.1} parent=1 // pred_fallthru
      _
    // Predicated region
    $region18: #{tpu_custom_call.1} parent=1 // pred_check
      _
    $region19: #{tpu_custom_call.1} parent=1 // pred_check_branch
      %217 = sbr.rel (0) target = $region21
    $region20: #{tpu_custom_call.1} parent=1 // pred_region
      %218 = dma.done [#allocation3], 128
    $region21: #{tpu_custom_call.1} parent=1 // pred_fallthru
      _
    %219 = vsyncpa [#allocation3], 1

</llo_original>
